<compile_context>
chip_gen: v7x
topology: tpu7x:2x2x1
jax: 0.10.0
libtpu: 0.0.40
codegen_flags: <defaults>
</compile_context>

<pallas_src>
import functools

import jax
import jax.numpy as jnp
from jax.experimental import pallas as pl
from jax.experimental.pallas import tpu as pltpu


def _xent_kernel(logits_ref, target_ref, out_ref, m_sc, s_sc, t_sc,
                 *, valid_seq, vocab, vocab_tail):
    """Grid = (batch, seq_tiles, vocab_tiles); vocab (reduction) axis innermost.

    logits_ref: (1, tile_s, tile_v)  input dtype
    target_ref: (1, tile_s, 1)       int32 (already shifted by +1 in wrapper)
    out_ref   : (1, 1, 1)            f32, per-batch loss sum (reduced in wrapper)
    m_sc      : (tile_s, 1) compute-dtype running max
    s_sc/t_sc : (tile_s, 1) f32      running exp-sum / target logit
    """
    st = pl.program_id(1)
    vt = pl.program_id(2)
    n_vt = pl.num_programs(2)

    tile_s = logits_ref.shape[1]
    tile_v = logits_ref.shape[2]
    cdt = m_sc.dtype  # compute dtype (bf16 when logits are bf16, else f32)

    # Per-batch output block: init once per batch (first seq & vocab tile).
    @pl.when((st == 0) & (vt == 0))
    def _():
        out_ref[...] = jnp.zeros_like(out_ref)

    # Reset per-row-tile online-LSE state at the first vocab tile.
    @pl.when(vt == 0)
    def _():
        m_sc[...] = jnp.full_like(m_sc, -jnp.inf)
        s_sc[...] = jnp.zeros_like(s_sc)
        t_sc[...] = jnp.zeros_like(t_sc)

    logits = logits_ref[0].astype(cdt)   # [tile_s, tile_v]; no-op when dtypes match
    tgt = target_ref[0]                  # [tile_s, 1] int32

    # Raw lane index within the tile (no per-element global offset added).
    col = jax.lax.broadcasted_iota(jnp.int32, (tile_s, tile_v), 1)

    if vocab_tail:
        # Statically emitted only when vocab % tile_v != 0.
        masked = jnp.where(col < (vocab - vt * tile_v), logits,
                           jnp.asarray(-jnp.inf, dtype=cdt))
    else:
        masked = logits

    # Online logsumexp update (single pass over vocab tiles), in compute dtype.
    m_tile = jnp.max(masked, axis=-1, keepdims=True)             # [tile_s, 1]
    m_new = jnp.maximum(m_sc[...], m_tile)
    alpha = jnp.exp((m_sc[...] - m_new).astype(jnp.float32))     # [tile_s, 1] f32
    p = jnp.exp(masked - m_new)                                   # [tile_s, tile_v] cdt
    s_sc[...] = alpha * s_sc[...] + jnp.sum(p.astype(jnp.float32),
                                            axis=-1, keepdims=True)
    m_sc[...] = m_new

    # Target logit: exactly one lane per row matches (or none in this tile); the
    # sum of one nonzero value + zeros is exact even in bf16, so upcast afterwards.
    t_hit = jnp.where(col == (tgt - vt * tile_v), logits, jnp.asarray(0.0, dtype=cdt))
    t_sc[...] = t_sc[...] + jnp.sum(t_hit, axis=-1, keepdims=True).astype(jnp.float32)

    # Finalize this row tile on the last vocab tile: add into the per-batch sum.
    @pl.when(vt == n_vt - 1)
    def _():
        lse = m_sc[...].astype(jnp.float32) + jnp.log(s_sc[...])   # [tile_s, 1]
        per_row = lse - t_sc[...]
        # Mask the excluded last seq position (>= S-1) and seq-padding rows.
        row_idx = jax.lax.broadcasted_iota(jnp.int32, (tile_s, 1), 0) + st * tile_s
        per_row = jnp.where(row_idx < valid_seq, per_row, 0.0)
        out_ref[...] = out_ref[...] + jnp.sum(per_row)


def _vmem_capacity_bytes() -> int:
    try:
        return int(pltpu.get_tpu_info().vmem_capacity_bytes)
    except Exception:
        return 64 * 1024 * 1024   # conservative (v7x-class) fallback


def _choose_tiles(seq_len: int, vocab: int, dtype):
    """Pick (tile_s, tile_v, vmem_limit_bytes), dtype- and generation-aware.

    Block size targets the HBM-roofline plateau (>=2-4 MiB per DMA block) while
    keeping the in-kernel full-tile temporaries + double-buffered inputs well
    inside the per-chip scoped-VMEM budget (64 MiB/TC on v7x, 128 MiB on v5e/v6e).
    """
    itemsize = jnp.dtype(dtype).itemsize
    sublane_mult = 8 * max(1, 4 // max(1, itemsize))   # 8 f32, 16 bf16, 32 int8/fp8

    vmem_cap = _vmem_capacity_bytes()
    if vmem_cap <= 64 * 1024 * 1024:       # v7x-class: 64 MiB VMEM per TensorCore
        block_bytes = 2 * 1024 * 1024
        vmem_limit = 32 * 1024 * 1024
    else:                                  # v5e / v6e: 128 MiB VMEM
        block_bytes = 4 * 1024 * 1024
        vmem_limit = 64 * 1024 * 1024

    budget_elems = max(block_bytes // itemsize, sublane_mult * 128)

    if vocab * sublane_mult <= budget_elems:
        tile_v = vocab                                        # full vocab, single pass
    else:
        tile_v = max(128, (budget_elems // sublane_mult) // 128 * 128)

    max_rows = max(sublane_mult, budget_elems // tile_v)
    if seq_len <= max_rows:
        tile_s = seq_len                                      # equals full dim -> OK
    else:
        tile_s = max(sublane_mult, (max_rows // sublane_mult) * sublane_mult)
    return tile_s, tile_v, vmem_limit


def next_token_softmax_cross_entropy_loss(preds: jax.Array, target: jax.Array,
                                          *, tile_s: int | None = None,
                                          tile_v: int | None = None) -> jax.Array:
    """preds: [B, S, V] float logits; target: [B, S] integer ids. Returns scalar f32."""
    b, s, v = preds.shape
    assert target.shape == (b, s)
    assert s >= 2, "need at least 2 tokens for next-token loss"

    n_valid = b * (s - 1)

    # bf16 inputs keep the per-element math in bf16 (packed vregs / bf16 VPU+EUP);
    # everything else computes in f32.
    compute_dtype = jnp.bfloat16 if preds.dtype == jnp.bfloat16 else jnp.float32

    # Tiny glue on the target only: shift by one token and pad back to length S
    # so its seq tiling aligns with preds (no copy of the logits is made).
    tgt_shifted = jnp.pad(target[:, 1:].astype(jnp.int32), ((0, 0), (0, 1)))
    tgt_shifted = tgt_shifted[:, :, None]                     # [B, S, 1]

    auto_s, auto_v, vmem_limit = _choose_tiles(s, v, preds.dtype)
    ts = tile_s if tile_s is not None else auto_s
    tv = tile_v if tile_v is not None else auto_v

    n_st = pl.cdiv(s - 1, ts)      # only rows 0..S-2 contribute
    n_vt = pl.cdiv(v, tv)
    grid = (b, n_st, n_vt)

    partial = pl.pallas_call(
        functools.partial(_xent_kernel, valid_seq=s - 1, vocab=v,
                          vocab_tail=(v % tv != 0)),
        out_shape=jax.ShapeDtypeStruct((b, 1, 1), jnp.float32),
        grid_spec=pltpu.PrefetchScalarGridSpec(
            num_scalar_prefetch=0,
            grid=grid,
            in_specs=[
                pl.BlockSpec((1, ts, tv), lambda bi, si, vi: (bi, si, vi)),
                pl.BlockSpec((1, ts, 1), lambda bi, si, vi: (bi, si, 0)),
            ],
            out_specs=pl.BlockSpec((1, 1, 1), lambda bi, si, vi: (bi, 0, 0)),
            scratch_shapes=[
                pltpu.VMEM((ts, 1), compute_dtype),   # running max
                pltpu.VMEM((ts, 1), jnp.float32),     # running exp-sum
                pltpu.VMEM((ts, 1), jnp.float32),     # target logit
            ],
        ),
        compiler_params=pltpu.CompilerParams(
            # Batch axis is independent (per-batch output block + per-core scratch),
            # so it can be sharded across TensorCores; seq/vocab reduce sequentially.
            dimension_semantics=("parallel", "arbitrary", "arbitrary"),
            vmem_limit_bytes=vmem_limit,
        ),
    )(preds, tgt_shifted)

    # Per-batch partial sums reduced here (better f32 accuracy than one serial scalar).
    return jnp.sum(partial) / jnp.float32(n_valid)


def _reference_loss(preds, target):
    b, s, v = preds.shape
    logits = preds[:, :-1, :].reshape(-1, v).astype(jnp.float32)
    tgt = target[:, 1:].reshape(-1).astype(jnp.int32)
    logp = jax.nn.log_softmax(logits, axis=-1)
    return -jnp.mean(jnp.take_along_axis(logp, tgt[:, None], axis=-1))


if __name__ == "__main__":
    key = jax.random.PRNGKey(0)
    k1, k2, k3, k4, k5, k6 = jax.random.split(key, 6)

    # Test 1: basic small shape (single seq tile, single vocab tile, f32).
    batch, seq, vocab = 2, 8, 32
    preds = jax.random.normal(k1, (batch, seq, vocab), dtype=jnp.float32)
    target = jax.random.randint(k2, (batch, seq), 0, vocab, dtype=jnp.int32)

    loss = next_token_softmax_cross_entropy_loss(preds, target)
    jax.block_until_ready(loss)
    ref = _reference_loss(preds, target)
    assert jnp.allclose(loss, ref, atol=1e-5, rtol=1e-5), (loss, ref)

    # Test 2: forced small tiles on ragged dims to exercise the tiled grid,
    # online-LSE across vocab tiles, and row/vocab tail masking (f32).
    b2, s2, v2 = 2, 24, 320
    preds2 = jax.random.normal(k3, (b2, s2, v2), dtype=jnp.float32)
    target2 = jax.random.randint(k4, (b2, s2), 0, v2, dtype=jnp.int32)

    loss2 = next_token_softmax_cross_entropy_loss(preds2, target2,
                                                  tile_s=8, tile_v=128)
    jax.block_until_ready(loss2)
    ref2 = _reference_loss(preds2, target2)
    assert jnp.allclose(loss2, ref2, atol=1e-5, rtol=1e-5), (loss2, ref2)

    # Test 3: bf16 logits exercise the bf16-native elementwise path
    # (looser tolerance: bf16 exp/subtract rounding in the online LSE).
    preds3 = jax.random.normal(k5, (b2, s2, v2), dtype=jnp.float32).astype(jnp.bfloat16)
    target3 = jax.random.randint(k6, (b2, s2), 0, v2, dtype=jnp.int32)

    loss3 = next_token_softmax_cross_entropy_loss(preds3, target3)
    jax.block_until_ready(loss3)
    ref3 = _reference_loss(preds3, target3)
    assert jnp.allclose(loss3, ref3, atol=5e-2, rtol=5e-2), (loss3, ref3)

    print("KERNEL_OK")
</pallas_src>

<mosaic_0001>
module attributes {stable_mosaic.version = 11 : i64} {
  func.func @_xent_kernel(%arg0: i32, %arg1: i32, %arg2: i32, %arg3: memref<1x8x32xf32, #tpu.memory_space<vmem>>, %arg4: memref<1x8x1xi32, #tpu.memory_space<vmem>>, %arg5: memref<1x1x1xf32, #tpu.memory_space<vmem>>, %arg6: memref<8x1xf32, #tpu.memory_space<vmem>>, %arg7: memref<8x1xf32, #tpu.memory_space<vmem>>, %arg8: memref<8x1xf32, #tpu.memory_space<vmem>>) attributes {dimension_semantics = [#tpu.dimension_semantics<parallel>, #tpu.dimension_semantics<arbitrary>, #tpu.dimension_semantics<arbitrary>], iteration_bounds = array<i64: 2, 1, 1>, scalar_prefetch = 0 : i64, scratch_operands = 3 : i64, tpu.core_type = #tpu.core_type<tc>, window_params = [{transform_indices = @transform_0, window_bounds = array<i64: 1, 8, 32>}, {transform_indices = @transform_1, window_bounds = array<i64: 1, 8, 1>}, {transform_indices = @transform_2, window_bounds = array<i64: 1, 1, 1>}]} {
    %c0_i32 = arith.constant 0 : i32
    %0 = arith.cmpi eq, %arg1, %c0_i32 : i32
    %c0_i32_0 = arith.constant 0 : i32
    %1 = arith.cmpi eq, %arg2, %c0_i32_0 : i32
    %2 = arith.andi %0, %1 : i1
    %3 = arith.extui %2 : i1 to i32
    %c0_i32_1 = arith.constant 0 : i32
    %4 = arith.cmpi ne, %3, %c0_i32_1 : i32
    scf.if %4 {
      %cst_28 = arith.constant 0.000000e+00 : f32
      %45 = vector.broadcast %cst_28 : f32 to vector<1x1x1xf32>
      %c0_29 = arith.constant 0 : index
      %c0_30 = arith.constant 0 : index
      %c0_31 = arith.constant 0 : index
      %46 = vector.load %arg5[%c0_29, %c0_30, %c0_31] : memref<1x1x1xf32, #tpu.memory_space<vmem>>, vector<1x1x1xf32>
      tpu.vector_store %arg5[%c0_29, %c0_30, %c0_31], %45 {strides = array<i32>} : memref<1x1x1xf32, #tpu.memory_space<vmem>>, vector<1x1x1xf32>,
    } else {
    }
    %c0_i32_2 = arith.constant 0 : i32
    %5 = arith.cmpi eq, %arg2, %c0_i32_2 : i32
    %6 = arith.extui %5 : i1 to i32
    %c0_i32_3 = arith.constant 0 : i32
    %7 = arith.cmpi ne, %6, %c0_i32_3 : i32
    scf.if %7 {
      %cst_28 = arith.constant 0xFF800000 : f32
      %45 = vector.broadcast %cst_28 : f32 to vector<8x1xf32>
      %c0_29 = arith.constant 0 : index
      %c0_30 = arith.constant 0 : index
      %46 = vector.load %arg6[%c0_29, %c0_30] : memref<8x1xf32, #tpu.memory_space<vmem>>, vector<8x1xf32>
      tpu.vector_store %arg6[%c0_29, %c0_30], %45 {strides = array<i32>} : memref<8x1xf32, #tpu.memory_space<vmem>>, vector<8x1xf32>,
      %cst_31 = arith.constant 0.000000e+00 : f32
      %47 = vector.broadcast %cst_31 : f32 to vector<8x1xf32>
      %c0_32 = arith.constant 0 : index
      %c0_33 = arith.constant 0 : index
      %48 = vector.load %arg7[%c0_32, %c0_33] : memref<8x1xf32, #tpu.memory_space<vmem>>, vector<8x1xf32>
      tpu.vector_store %arg7[%c0_32, %c0_33], %47 {strides = array<i32>} : memref<8x1xf32, #tpu.memory_space<vmem>>, vector<8x1xf32>,
      %cst_34 = arith.constant 0.000000e+00 : f32
      %49 = vector.broadcast %cst_34 : f32 to vector<8x1xf32>
      %c0_35 = arith.constant 0 : index
      %c0_36 = arith.constant 0 : index
      %50 = vector.load %arg8[%c0_35, %c0_36] : memref<8x1xf32, #tpu.memory_space<vmem>>, vector<8x1xf32>
      tpu.vector_store %arg8[%c0_35, %c0_36], %49 {strides = array<i32>} : memref<8x1xf32, #tpu.memory_space<vmem>>, vector<8x1xf32>,
    } else {
    }
    %c0 = arith.constant 0 : index
    %c0_4 = arith.constant 0 : index
    %c0_5 = arith.constant 0 : index
    %8 = vector.load %arg3[%c0, %c0_4, %c0_5] : memref<1x8x32xf32, #tpu.memory_space<vmem>>, vector<1x8x32xf32>
    %9 = vector.shape_cast %8 : vector<1x8x32xf32> to vector<8x32xf32>
    %c0_6 = arith.constant 0 : index
    %c0_7 = arith.constant 0 : index
    %c0_8 = arith.constant 0 : index
    %10 = vector.load %arg4[%c0_6, %c0_7, %c0_8] : memref<1x8x1xi32, #tpu.memory_space<vmem>>, vector<1x8x1xi32>
    %11 = vector.shape_cast %10 : vector<1x8x1xi32> to vector<8x1xi32>
    %12 = tpu.iota {dimensions = array<i32: 1>} : vector<8x32xi32>
    %cst = arith.constant dense<0xFF800000> : vector<8xf32>
    %13 = vector.multi_reduction <maximumf>, %9, %cst [1] : vector<8x32xf32> to vector<8xf32>
    %14 = vector.shape_cast %13 : vector<8xf32> to vector<8x1xf32>
    %c0_9 = arith.constant 0 : index
    %c0_10 = arith.constant 0 : index
    %15 = vector.load %arg6[%c0_9, %c0_10] : memref<8x1xf32, #tpu.memory_space<vmem>>, vector<8x1xf32>
    %16 = arith.maximumf %15, %14 : vector<8x1xf32>
    %c0_11 = arith.constant 0 : index
    %c0_12 = arith.constant 0 : index
    %17 = vector.load %arg6[%c0_11, %c0_12] : memref<8x1xf32, #tpu.memory_space<vmem>>, vector<8x1xf32>
    %18 = arith.subf %17, %16 : vector<8x1xf32>
    %19 = math.exp %18 : vector<8x1xf32>
    %20 = vector.broadcast %16 : vector<8x1xf32> to vector<8x32xf32>
    %21 = arith.subf %9, %20 : vector<8x32xf32>
    %22 = math.exp %21 : vector<8x32xf32>
    %c0_13 = arith.constant 0 : index
    %c0_14 = arith.constant 0 : index
    %23 = vector.load %arg7[%c0_13, %c0_14] : memref<8x1xf32, #tpu.memory_space<vmem>>, vector<8x1xf32>
    %24 = arith.mulf %19, %23 : vector<8x1xf32>
    %cst_15 = arith.constant dense<0.000000e+00> : vector<8xf32>
    %25 = vector.multi_reduction <add>, %22, %cst_15 [1] : vector<8x32xf32> to vector<8xf32>
    %26 = vector.shape_cast %25 : vector<8xf32> to vector<8x1xf32>
    %27 = arith.addf %24, %26 : vector<8x1xf32>
    %c0_16 = arith.constant 0 : index
    %c0_17 = arith.constant 0 : index
    %28 = vector.load %arg7[%c0_16, %c0_17] : memref<8x1xf32, #tpu.memory_space<vmem>>, vector<8x1xf32>
    tpu.vector_store %arg7[%c0_16, %c0_17], %27 {strides = array<i32>} : memref<8x1xf32, #tpu.memory_space<vmem>>, vector<8x1xf32>,
    %c0_18 = arith.constant 0 : index
    %c0_19 = arith.constant 0 : index
    %29 = vector.load %arg6[%c0_18, %c0_19] : memref<8x1xf32, #tpu.memory_space<vmem>>, vector<8x1xf32>
    tpu.vector_store %arg6[%c0_18, %c0_19], %16 {strides = array<i32>} : memref<8x1xf32, #tpu.memory_space<vmem>>, vector<8x1xf32>,
    %c32_i32 = arith.constant 32 : i32
    %30 = arith.muli %arg2, %c32_i32 : i32
    %31 = vector.broadcast %30 : i32 to vector<8x1xi32>
    %32 = arith.subi %11, %31 : vector<8x1xi32>
    %33 = vector.broadcast %32 : vector<8x1xi32> to vector<8x32xi32>
    %34 = arith.cmpi eq, %12, %33 : vector<8x32xi32>
    %cst_20 = arith.constant 0.000000e+00 : f32
    %35 = vector.broadcast %cst_20 : f32 to vector<8x32xf32>
    %36 = arith.select %34, %9, %35 : vector<8x32xi1>, vector<8x32xf32>
    %c0_21 = arith.constant 0 : index
    %c0_22 = arith.constant 0 : index
    %37 = vector.load %arg8[%c0_21, %c0_22] : memref<8x1xf32, #tpu.memory_space<vmem>>, vector<8x1xf32>
    %cst_23 = arith.constant dense<0.000000e+00> : vector<8xf32>
    %38 = vector.multi_reduction <add>, %36, %cst_23 [1] : vector<8x32xf32> to vector<8xf32>
    %39 = vector.shape_cast %38 : vector<8xf32> to vector<8x1xf32>
    %40 = arith.addf %37, %39 : vector<8x1xf32>
    %c0_24 = arith.constant 0 : index
    %c0_25 = arith.constant 0 : index
    %41 = vector.load %arg8[%c0_24, %c0_25] : memref<8x1xf32, #tpu.memory_space<vmem>>, vector<8x1xf32>
    tpu.vector_store %arg8[%c0_24, %c0_25], %40 {strides = array<i32>} : memref<8x1xf32, #tpu.memory_space<vmem>>, vector<8x1xf32>,
    %c0_i32_26 = arith.constant 0 : i32
    %42 = arith.cmpi eq, %arg2, %c0_i32_26 : i32
    %43 = arith.extui %42 : i1 to i32
    %c0_i32_27 = arith.constant 0 : i32
    %44 = arith.cmpi ne, %43, %c0_i32_27 : i32
    scf.if %44 {
      %c0_28 = arith.constant 0 : index
      %c0_29 = arith.constant 0 : index
      %45 = vector.load %arg6[%c0_28, %c0_29] : memref<8x1xf32, #tpu.memory_space<vmem>>, vector<8x1xf32>
      %c0_30 = arith.constant 0 : index
      %c0_31 = arith.constant 0 : index
      %46 = vector.load %arg7[%c0_30, %c0_31] : memref<8x1xf32, #tpu.memory_space<vmem>>, vector<8x1xf32>
      %47 = math.log %46 : vector<8x1xf32>
      %48 = arith.addf %45, %47 : vector<8x1xf32>
      %c0_32 = arith.constant 0 : index
      %c0_33 = arith.constant 0 : index
      %49 = vector.load %arg8[%c0_32, %c0_33] : memref<8x1xf32, #tpu.memory_space<vmem>>, vector<8x1xf32>
      %50 = arith.subf %48, %49 : vector<8x1xf32>
      %51 = tpu.iota {dimensions = array<i32: 0>} : vector<8x1xi32>
      %c8_i32 = arith.constant 8 : i32
      %52 = arith.muli %arg1, %c8_i32 : i32
      %53 = vector.broadcast %52 : i32 to vector<8x1xi32>
      %54 = arith.addi %51, %53 : vector<8x1xi32>
      %c7_i32 = arith.constant 7 : i32
      %55 = vector.broadcast %c7_i32 : i32 to vector<8x1xi32>
      %56 = arith.cmpi slt, %54, %55 : vector<8x1xi32>
      %cst_34 = arith.constant 0.000000e+00 : f32
      %57 = vector.broadcast %cst_34 : f32 to vector<8x1xf32>
      %58 = arith.select %56, %50, %57 : vector<8x1xi1>, vector<8x1xf32>
      %c0_35 = arith.constant 0 : index
      %c0_36 = arith.constant 0 : index
      %c0_37 = arith.constant 0 : index
      %59 = vector.load %arg5[%c0_35, %c0_36, %c0_37] : memref<1x1x1xf32, #tpu.memory_space<vmem>>, vector<1x1x1xf32>
      %60 = vector.shape_cast %58 : vector<8x1xf32> to vector<1x8x1xf32>
      %cst_38 = arith.constant dense<0.000000e+00> : vector<1xf32>
      %61 = vector.multi_reduction <add>, %60, %cst_38 [1, 2] : vector<1x8x1xf32> to vector<1xf32>
      %62 = vector.shape_cast %61 : vector<1xf32> to vector<1x1x1xf32>
      %63 = vector.extract %62[0, 0, 0] : f32 from vector<1x1x1xf32>
      %64 = vector.broadcast %63 : f32 to vector<1x1x1xf32>
      %65 = arith.addf %59, %64 : vector<1x1x1xf32>
      %c0_39 = arith.constant 0 : index
      %c0_40 = arith.constant 0 : index
      %c0_41 = arith.constant 0 : index
      %66 = vector.load %arg5[%c0_39, %c0_40, %c0_41] : memref<1x1x1xf32, #tpu.memory_space<vmem>>, vector<1x1x1xf32>
      tpu.vector_store %arg5[%c0_39, %c0_40, %c0_41], %65 {strides = array<i32>} : memref<1x1x1xf32, #tpu.memory_space<vmem>>, vector<1x1x1xf32>,
    } else {
    }
    return
  }
  func.func @transform_0(%arg0: i32, %arg1: i32, %arg2: i32) -> (i32, i32, i32) {
    %c0_i32 = arith.constant 0 : i32
    return %arg0, %arg1, %arg2 : i32, i32, i32
  }
  func.func @transform_1(%arg0: i32, %arg1: i32, %arg2: i32) -> (i32, i32, i32) {
    %c0_i32 = arith.constant 0 : i32
    %c0_i32_0 = arith.constant 0 : i32
    return %arg0, %arg1, %c0_i32 : i32, i32, i32
  }
  func.func @transform_2(%arg0: i32, %arg1: i32, %arg2: i32) -> (i32, i32, i32) {
    %c0_i32 = arith.constant 0 : i32
    %c0_i32_0 = arith.constant 0 : i32
    %c0_i32_1 = arith.constant 0 : i32
    return %arg0, %c0_i32, %c0_i32_0 : i32, i32, i32
  }
}

</mosaic_0001>

<llo_original>
// kernel: tpu_custom_call.1
$region0: #{tpu_custom_call.1}
  #allocation0 [shape = 'u32[]', space=smem, size = 0x4, offset = 0x4, fixed_abs, tag = 'smem constant byte address 0x4 - core index']
  #allocation1 [shape = 'u32[144,128]{1,0:T(1,128)}', space=vmem, size = 0x12000, scoped, tag = 'internal scratch']
  #allocation2 [shape = 'f32[8,1]{1,0:T(8,128)}', space=vmem, size = 0x1000, scoped, tag = 'scratch operand']
  #allocation3 [shape = 'f32[8,1]{1,0:T(8,128)}', space=vmem, size = 0x1000, scoped, tag = 'scratch operand']
  #allocation4 [shape = 'f32[8,1]{1,0:T(8,128)}', space=vmem, size = 0x1000, scoped, tag = 'scratch operand']
  %s0 = inlined_call_operand.vmem [shape: f32[2,8,32], index: 0, kind: input, shape index: {}]
  %s1 = inlined_call_operand.vmem [shape: s32[2,8,1], index: 1, kind: input, shape index: {}]
  %s2 = inlined_call_operand.vmem [shape: f32[2,1,1], index: 2, kind: output, shape index: {}]
  %s3 = sld [smem:[#allocation0]]
  $region53: #{tpu_custom_call.1} parent=0
    _
  %s5 = ssub.s32 1, %s3
  %s6 = scalar_select 0, %s5, %s3
  loop: start=0, step=1, limit=4
  $region2: #{tpu_custom_call.1} parent=0 // loop_pre_header
    _
  $region3: #{tpu_custom_call.1} parent=0 // loop_header
    %s8 = sphi 0, %s12
    %p9 = scmp.ge.s32.totalorder %s8, 4
    %s15 = sphi 0, %s34
    %s16 = sphi 0, %s30
    %s17 = sphi 0, %s26
    %s18 = sphi 0, %s15
    %s19 = sphi 0, %s16
    %s20 = sphi 0, %s17
    %s21 = sphi 0, %s18
    %s22 = sphi 0, %s19
    %s23 = sphi 0, %s20
    %s41 = sphi 0, %s43
    %s44 = sphi 0, %s41
    %s45 = sphi 0, %s44
    %s61 = sphi 0, %s45
    %s69 = sphi 0, %s71
    %s72 = sphi 0, %s69
    %s73 = sphi 0, %s72
    %s89 = sphi 0, %s73
    %s95 = sphi 0, %s97
    %s98 = sphi 0, %s95
    %s99 = sphi 0, %s98
    %s115 = sphi 0, %s99
  $region4: #{tpu_custom_call.1} parent=0 // loop_header_branch
    %11 = sbr.rel (%p9) target = $region8
  $region5: #{tpu_custom_call.1} parent=0 // loop_body
    %s13 = ssub.s32 %s8, 1
    %s14 = ssub.s32 %s8, 2
    %s24 = sadd.s32 1, %s17
    %p25 = scmp.ge.s32.totalorder %s24, 1
    %s26 = scalar_select %p25, 0, %s24
    %s27 = sadd.s32 1, %s16
    %s28 = scalar_select %p25, %s27, %s16
    %p29 = scmp.ge.s32.totalorder %s28, 1
    %s30 = scalar_select %p29, 0, %s28
    %s31 = sadd.s32 1, %s15
    %s32 = scalar_select %p29, %s31, %s15
    %p33 = scmp.ge.s32.totalorder %s32, 2
    %s34 = scalar_select %p33, 0, %s32
    %s35 = ssub.s32 %s15, %s34
    %s36 = ssub.s32 %s16, %s30
    %s37 = sor.u32 %s35, %s36
    %s38 = ssub.s32 %s17, %s26
    %s39 = sor.u32 %s37, %s38
    %p40 = scmp.eq.s32.totalorder %s39, 0
    %s42 = sadd.s32 %s41, 1
    %s43 = scalar_select %p40, %s41, %s42
    %p46 = pneg %p40
    %p47 = scmp.eq.s32.totalorder %s8, 1
    %p48 = por %p46, %p47
    %p49 = scmp.ne.s32.totalorder %s41, %s44
    %p50 = scmp.eq.s32.totalorder %s8, 0
    %p51 = por %p49, %p50
    %p52 = scmp.ne.s32.totalorder %s41, %s44
    %p53 = scmp.eq.s32.totalorder %s13, 1
    %p54 = por %p52, %p53
    %p55 = scmp.ne.s32.totalorder %s44, %s45
    %p56 = scmp.eq.s32.totalorder %s13, 0
    %p57 = por %p55, %p56
    %p58 = scmp.ne.s32.totalorder %s44, %s45
    %p59 = scmp.eq.s32.totalorder %s14, 1
    %p60 = por %p58, %p59
    %p62 = scmp.ne.s32.totalorder %s45, %s61
    %p63 = scmp.eq.s32.totalorder %s14, 0
    %p64 = por %p62, %p63
    %s65 = ssub.s32 %s15, %s34
    %s66 = ssub.s32 %s16, %s30
    %s67 = sor.u32 %s65, %s66
    %p68 = scmp.eq.s32.totalorder %s67, 0
    %s70 = sadd.s32 %s69, 1
    %s71 = scalar_select %p68, %s69, %s70
    %p74 = pneg %p68
    %p75 = scmp.eq.s32.totalorder %s8, 1
    %p76 = por %p74, %p75
    %p77 = scmp.ne.s32.totalorder %s69, %s72
    %p78 = scmp.eq.s32.totalorder %s8, 0
    %p79 = por %p77, %p78
    %p80 = scmp.ne.s32.totalorder %s69, %s72
    %p81 = scmp.eq.s32.totalorder %s13, 1
    %p82 = por %p80, %p81
    %p83 = scmp.ne.s32.totalorder %s72, %s73
    %p84 = scmp.eq.s32.totalorder %s13, 0
    %p85 = por %p83, %p84
    %p86 = scmp.ne.s32.totalorder %s72, %s73
    %p87 = scmp.eq.s32.totalorder %s14, 1
    %p88 = por %p86, %p87
    %p90 = scmp.ne.s32.totalorder %s73, %s89
    %p91 = scmp.eq.s32.totalorder %s14, 0
    %p92 = por %p90, %p91
    %s93 = ssub.s32 %s15, %s34
    %p94 = scmp.eq.s32.totalorder %s93, 0
    %s96 = sadd.s32 %s95, 1
    %s97 = scalar_select %p94, %s95, %s96
    %p100 = pneg %p94
    %p101 = scmp.eq.s32.totalorder %s8, 1
    %p102 = por %p100, %p101
    %p103 = scmp.ne.s32.totalorder %s95, %s98
    %p104 = scmp.eq.s32.totalorder %s8, 0
    %p105 = por %p103, %p104
    %p106 = scmp.ne.s32.totalorder %s95, %s98
    %p107 = scmp.eq.s32.totalorder %s13, 1
    %p108 = por %p106, %p107
    %p109 = scmp.ne.s32.totalorder %s98, %s99
    %p110 = scmp.eq.s32.totalorder %s13, 0
    %p111 = por %p109, %p110
    %p112 = scmp.ne.s32.totalorder %s98, %s99
    %p113 = scmp.eq.s32.totalorder %s14, 1
    %p114 = por %p112, %p113
    %p116 = scmp.ne.s32.totalorder %s99, %s115
    %p117 = scmp.eq.s32.totalorder %s14, 0
    %p118 = por %p116, %p117
    %p119 = scmp.le.s32.totalorder 1, %s8
    %p120 = scmp.lt.s32.totalorder %s8, 3
    %p121 = pnand %p119, %p120
    %p122 = pneg %p121
    // Predicated region
    $region9: #{tpu_custom_call.1} parent=5 // pred_check
      _
    $region10: #{tpu_custom_call.1} parent=5 // pred_check_branch
      %124 = sbr.rel (%p121) target = $region12
    $region11: #{tpu_custom_call.1} parent=5 // pred_region
      %s125 = ssub.s32 %s8, 1
    $region12: #{tpu_custom_call.1} parent=5 // pred_fallthru
      _
    %p126 = scmp.lt.s32.totalorder %s8, 2
    // Predicated region
    $region13: #{tpu_custom_call.1} parent=5 // pred_check
      %p127 = pneg %p126
    $region14: #{tpu_custom_call.1} parent=5 // pred_check_branch
      %129 = sbr.rel (%p127) target = $region16
    $region15: #{tpu_custom_call.1} parent=5 // pred_region
      // Predicated region
      $region17: #{tpu_custom_call.1} parent=15 // pred_check
        %p130 = pneg %p51
      $region18: #{tpu_custom_call.1} parent=15 // pred_check_branch
        %132 = sbr.rel (%p130) target = $region20
      $region19: #{tpu_custom_call.1} parent=15 // pred_region
        %p133 = scmp.lt.s32.totalorder %s15, 1
        %s134 = scalar_select %p133, %s15, 1
        %p135 = scmp.lt.s32.totalorder %s16, 0
        %s136 = scalar_select %p135, %s16, 0
        %p137 = scmp.lt.s32.totalorder %s17, 0
        %s138 = scalar_select %p137, %s17, 0
        %s139 = sadd.s32 %s138, %s136
        %s140 = sadd.s32 %s139, %s134
        %s141 = smul.addr %s140, 8
        %s142 = scalar_lea.vmem %s0, %s141
      $region20: #{tpu_custom_call.1} parent=15 // pred_fallthru
        _
      // Predicated region
      $region21: #{tpu_custom_call.1} parent=15 // pred_check
        %p143 = pneg %p79
      $region22: #{tpu_custom_call.1} parent=15 // pred_check_branch
        %145 = sbr.rel (%p143) target = $region24
      $region23: #{tpu_custom_call.1} parent=15 // pred_region
        %p146 = scmp.lt.s32.totalorder %s15, 1
        %s147 = scalar_select %p146, %s15, 1
        %p148 = scmp.lt.s32.totalorder %s16, 0
        %s149 = scalar_select %p148, %s16, 0
        %s150 = sadd.s32 %s149, %s147
        %s151 = smul.addr %s150, 8
        %s152 = scalar_lea.vmem %s1, %s151
      $region24: #{tpu_custom_call.1} parent=15 // pred_fallthru
        _
    $region16: #{tpu_custom_call.1} parent=5 // pred_fallthru
      _
    %p153 = scmp.le.s32.totalorder 1, %s8
    %p154 = scmp.lt.s32.totalorder %s8, 3
    %p155 = pnand %p153, %p154
    %p156 = pneg %p155
    // Predicated region
    $region25: #{tpu_custom_call.1} parent=5 // pred_check
      _
    $region26: #{tpu_custom_call.1} parent=5 // pred_check_branch
      %158 = sbr.rel (%p155) target = $region28
    $region27: #{tpu_custom_call.1} parent=5 // pred_region
      %s159 = ssub.s32 %s8, 1
      %p160 = scmp.lt.s32.totalorder %s18, 1
      %s161 = scalar_select %p160, %s18, 1
      %p162 = scmp.lt.s32.totalorder %s19, 0
      %s163 = scalar_select %p162, %s19, 0
      %p164 = scmp.lt.s32.totalorder %s20, 0
      %s165 = scalar_select %p164, %s20, 0
      %s166 = sadd.s32 %s165, %s163
      %s167 = sadd.s32 %s166, %s161
      %s168 = smul.addr %s167, 8
      %s169 = scalar_lea.vmem %s0, %s168
      %p170 = pneg %p57
      %p171 = pneg %p54
      %p172 = scmp.lt.s32.totalorder %s18, 1
      %s173 = scalar_select %p172, %s18, 1
      %p174 = scmp.lt.s32.totalorder %s19, 0
      %s175 = scalar_select %p174, %s19, 0
      %s176 = sadd.s32 %s175, %s173
      %s177 = smul.addr %s176, 8
      %s178 = scalar_lea.vmem %s1, %s177
      %p179 = pneg %p85
      %p180 = pneg %p82
      %p181 = pneg %p111
      %p182 = pneg %p108
      %p183 = scmp.lt.s32.totalorder %s18, 1
      %s184 = scalar_select %p183, %s18, 1
      %s185 = scalar_lea.vmem %s2, %s184
      %p186 = scmp.lt.s32.totalorder %s18, 1
      %s187 = scalar_select %p186, %s18, 1
      %p188 = scmp.lt.s32.totalorder %s19, 0
      %s189 = scalar_select %p188, %s19, 0
      %p190 = scmp.lt.s32.totalorder %s20, 0
      %s191 = scalar_select %p190, %s20, 0
      %s192 = sadd.s32 %s191, %s189
      %s193 = sadd.s32 %s192, %s187
      %s194 = smul.addr %s193, 8
      %s195 = scalar_lea.vmem %s0, %s194
      %p196 = scmp.lt.s32.totalorder %s18, 1
      %s197 = scalar_select %p196, %s18, 1
      %p198 = scmp.lt.s32.totalorder %s19, 0
      %s199 = scalar_select %p198, %s19, 0
      %s200 = sadd.s32 %s199, %s197
      %s201 = smul.addr %s200, 8
      %s202 = scalar_lea.vmem %s1, %s201
      %p203 = scmp.lt.s32.totalorder %s18, 1
      %s204 = scalar_select %p203, %s18, 1
      %s205 = scalar_lea.vmem %s2, %s204
      %p206 = scmp.eq.s32.totalorder %s19, 0
      %p207 = scmp.eq.s32.totalorder %s20, 0
      %p208 = pnand %p206, %p207
      %p209 = pneg %p208
      // Predicated region
      $region29: #{tpu_custom_call.1} parent=27 // pred_check
        _
      $region30: #{tpu_custom_call.1} parent=27 // pred_check_branch
        %211 = sbr.rel (%p208) target = $region32
      $region31: #{tpu_custom_call.1} parent=27 // pred_region
        %vm212 = vcmask 0
        %213 = vst.msk [vmem:[%s205] sm:$0x1] %vm212, 0.0
      $region32: #{tpu_custom_call.1} parent=27 // pred_fallthru
        _
      // Predicated region
      $region33: #{tpu_custom_call.1} parent=27 // pred_check
        %p214 = pneg %p207
      $region34: #{tpu_custom_call.1} parent=27 // pred_check_branch
        %216 = sbr.rel (%p214) target = $region36
      $region35: #{tpu_custom_call.1} parent=27 // pred_region
        %vm217 = vcmask 7168
        %218 = vst.msk [vmem:[#allocation2] sm:$0xff] %vm217, -inf
        %219 = vst.msk [vmem:[#allocation3] sm:$0xff] %vm217, 0.0
        %220 = vst.msk [vmem:[#allocation4] sm:$0xff] %vm217, 0.0
      $region36: #{tpu_custom_call.1} parent=27 // pred_fallthru
        _
      %v221 = vld [vmem:[%s195] sm:$0xff]
      %v222 = vld [vmem:[%s202] sm:$0xff]
      %v223 = vlaneseq
      %v224 = vand.u32 %v223, 127
      %vm225 = vcmask 261120
      %v226 = vsel %vm225, %v221, -inf
      %227 = vmax.xlane.f32.xlu0 %v226
      %v228 = vpop.xlane.xlu0 %227
      %v229 = vld [vmem:[#allocation2] sm:$0xff]
      %v230 = vmax.f32 %v229, %v228
      %v231 = vsub.f32 %v229, %v230
      %v232 = vmul.f32 %v231, 1.442695
      %v233 = vpow.pop %v232
      %235 = vset.pattern.permute.xlu0 0
      %236 = vperm.xlu0 %235, %v230
      %v237 = vpop.permute.xlu0 %236
      %v239 = vsub.f32 %v221, %v237
      %v240 = vmul.f32 %v239, 1.442695
      %v241 = vpow.pop %v240
      %v242 = vld [vmem:[#allocation3] sm:$0xff]
      %v243 = vmul.f32 %v233, %v242
      %v244 = vsel %vm225, %v241, 0.0
      %245 = vadd.xlane.f32.xlu0 %v244
      %v246 = vpop.xlane.xlu0 %245
      %v247 = vadd.f32 %v243, %v246
      %vm248 = vcmask 7168
      %249 = vst.msk [vmem:[#allocation3] sm:$0xff] %vm248, %v247
      %250 = vst.msk [vmem:[#allocation2] sm:$0xff] %vm248, %v230
      %s251 = smul.u32 %s20, 32
      %v252 = vstv %s251
      %v253 = vsub.s32 %v222, %v252
      %254 = vset.pattern.permute.xlu0 0
      %255 = vperm.xlu0 %254, %v253
      %v256 = vpop.permute.xlu0 %255
      %vm257 = vcmp.eq.s32.totalorder %v224, %v256
      %v258 = vsel %vm257, %v221, 0.0
      %v259 = vld [vmem:[#allocation4] sm:$0xff]
      %v260 = vsel %vm225, %v258, 0.0
      %261 = vadd.xlane.f32.xlu0 %v260
      %v262 = vpop.xlane.xlu0 %261
      %v263 = vadd.f32 %v259, %v262
      %264 = vst.msk [vmem:[#allocation4] sm:$0xff] %vm248, %v263
      // Predicated region
      $region37: #{tpu_custom_call.1} parent=27 // pred_check
        %p265 = pneg %p207
      $region38: #{tpu_custom_call.1} parent=27 // pred_check_branch
        %267 = sbr.rel (%p265) target = $region40
      $region39: #{tpu_custom_call.1} parent=27 // pred_region
        %v268 = vld [vmem:[#allocation2] sm:$0xff]
        %v269 = vld [vmem:[#allocation3] sm:$0xff]
        %v270 = vlog2.pop %v269
        %v271 = vmul.f32 %v270, 0.6931472
        %v272 = vadd.f32 %v268, %v271
        %v273 = vld [vmem:[#allocation4] sm:$0xff]
        %v274 = vsub.f32 %v272, %v273
        %v275 = vlaneseq
        %v276 = vshrl.u32 %v275, 7
        %s277 = smul.u32 %s19, 8
        %v278 = vstv %s277
        %v279 = vadd.s32 %v276, %v278
        %vm280 = vcmp.lt.s32.totalorder %v279, 7
        %v281 = vsel %vm280, %v274, 0.0
        %v282 = vld [vmem:[%s205] sm:$0x1]
        %v283 = vsel %vm248, %v281, 0.0
        %284 = vadd.xlane.f32.xlu0 %v283
        %v285 = vpop.xlane.xlu0 %284
        %v286 = vrot.slane %v285, 4
        %v287 = vadd.f32 %v285, %v286
        %v288 = vrot.slane %v287, 2
        %v289 = vadd.f32 %v287, %v288
        %v290 = vrot.slane %v289, 1
        %v291 = vadd.f32 %v289, %v290
        %s292 = vtos %v291
        %v293 = vstv %s292
        %v294 = vadd.f32 %v282, %v293
        %vm295 = vcmask 0
        %296 = vst.msk [vmem:[%s205] sm:$0x1] %vm295, %v294
      $region40: #{tpu_custom_call.1} parent=27 // pred_fallthru
        _
      %p297 = scmp.lt.s32.totalorder %s18, 1
      %s298 = scalar_select %p297, %s18, 1
      %s299 = scalar_lea.vmem %s2, %s298
      // Predicated region
      $region41: #{tpu_custom_call.1} parent=27 // pred_check
        %p300 = pneg %p108
      $region42: #{tpu_custom_call.1} parent=27 // pred_check_branch
        %302 = sbr.rel (%p300) target = $region44
      $region43: #{tpu_custom_call.1} parent=27 // pred_region
        _
      $region44: #{tpu_custom_call.1} parent=27 // pred_fallthru
        _
    $region28: #{tpu_custom_call.1} parent=5 // pred_fallthru
      _
    %p303 = scmp.le.s32.totalorder 2, %s8
    // Predicated region
    $region45: #{tpu_custom_call.1} parent=5 // pred_check
      %p304 = pneg %p303
    $region46: #{tpu_custom_call.1} parent=5 // pred_check_branch
      %306 = sbr.rel (%p304) target = $region48
    $region47: #{tpu_custom_call.1} parent=5 // pred_region
      %s307 = ssub.s32 %s8, 2
      // Predicated region
      $region49: #{tpu_custom_call.1} parent=47 // pred_check
        %p308 = pneg %p114
      $region50: #{tpu_custom_call.1} parent=47 // pred_check_branch
        %310 = sbr.rel (%p308) target = $region52
      $region51: #{tpu_custom_call.1} parent=47 // pred_region
        %p311 = scmp.lt.s32.totalorder %s21, 1
        %s312 = scalar_select %p311, %s21, 1
        %s313 = scalar_lea.vmem %s2, %s312
      $region52: #{tpu_custom_call.1} parent=47 // pred_fallthru
        _
    $region48: #{tpu_custom_call.1} parent=5 // pred_fallthru
      _
  $region6: #{tpu_custom_call.1} parent=0 // loop_footer
    %s12 = sadd.s32 1, %s8
  $region7: #{tpu_custom_call.1} parent=0 // loop_footer_branch
    %7 = sbr.rel target = $region3
  $region8: #{tpu_custom_call.1} parent=0 // loop_exit
    _

</llo_original>
